<compile_context>
chip_gen: v5e
topology: v5e:2x2
jax: 0.10.0
libtpu: 0.0.40
codegen_flags: <defaults>
</compile_context>

<pallas_src>
import math

import jax
import jax.numpy as jnp
from jax.experimental import pallas as pl
from jax.experimental.pallas import tpu as pltpu


def make_stconv_kernel(T, N, C0, C1, C2, C3, Kt):
    T1 = T - Kt + 1      # timesteps after first temporal block
    T2 = T1 - Kt + 1     # timesteps after second temporal block

    def kernel(x_ref, aT_ref, w1T_ref, b1_ref, thT_ref, w2T_ref, b2_ref, o_ref):
        X = x_ref[...]                        # (C0, T*N)  channel-major slab
        aT = aT_ref[...]                      # (N, N)     A_hat^T
        thT = thT_ref[...]                    # (C2, C1)   Theta^T

        # ---- TemporalBlock 1: Conv2d(C0 -> 2*C1, (Kt,1)) + GLU -------------
        # One fused-tap matmul, then Kt time-shifted slices combined on VPU.
        zf1 = jnp.dot(w1T_ref[...], X,
                      preferred_element_type=jnp.float32)   # (Kt*2C1, T*N)
        z1 = zf1[0:2 * C1, 0:T1 * N]
        for k in range(1, Kt):
            z1 = z1 + zf1[k * 2 * C1:(k + 1) * 2 * C1, k * N:k * N + T1 * N]
        z1 = z1 + b1_ref[...]                                 # bias once
        h1 = z1[:C1, :] * jax.nn.sigmoid(z1[C1:, :])          # (C1, T1*N)

        # ---- SpatialBlock: A_hat mixing (single dense matmul) then Theta ----
        # Re-tile (C1, T1*N) -> (T1*C1, N) via static slices + concat so the
        # node mixing is ONE (T1*C1, N) @ (N, N) matmul (no kron, no T1 loop).
        h1_rows = jnp.concatenate(
            [h1[:, t * N:(t + 1) * N] for t in range(T1)], axis=0)   # (T1*C1, N)
        sp_rows = jnp.dot(h1_rows, aT,
                          preferred_element_type=jnp.float32)        # (T1*C1, N)
        sp = jnp.concatenate(
            [sp_rows[t * C1:(t + 1) * C1, :] for t in range(T1)], axis=1)  # (C1, T1*N)
        h2 = jnp.maximum(
            jnp.dot(thT, sp, preferred_element_type=jnp.float32), 0.0)     # (C2, T1*N)
        # (the extra ReLU applied by STConvBlock.forward is idempotent)

        # ---- TemporalBlock 2: Conv2d(C2 -> 2*C3, (Kt,1)) + GLU -------------
        zf2 = jnp.dot(w2T_ref[...], h2,
                      preferred_element_type=jnp.float32)   # (Kt*2C3, T1*N)
        z2 = zf2[0:2 * C3, 0:T2 * N]
        for k in range(1, Kt):
            z2 = z2 + zf2[k * 2 * C3:(k + 1) * 2 * C3, k * N:k * N + T2 * N]
        z2 = z2 + b2_ref[...]
        h3 = z2[:C3, :] * jax.nn.sigmoid(z2[C3:, :])          # (C3, T2*N)

        # Output is already channel-major / lane-dense: store directly.
        o_ref[...] = h3.astype(o_ref.dtype)

    return kernel, T1, T2


def stconv_block_pallas(x, A_hat, params, Kt):
    (w1p, w1q, b1p, b1q, theta, w2p, w2q, b2p, b2q) = params
    B, T, N, C0 = x.shape
    C1 = w1p.shape[-1]
    C2 = theta.shape[-1]
    C3 = w2p.shape[-1]

    kernel, T1, T2 = make_stconv_kernel(T, N, C0, C1, C2, C3, Kt)

    # Fuse P|Q halves and the Kt taps; transpose to channel-major operands.
    w1 = jnp.concatenate([w1p, w1q], axis=-1)                       # (Kt, C0, 2*C1)
    w2 = jnp.concatenate([w2p, w2q], axis=-1)                       # (Kt, C2, 2*C3)
    w1T = jnp.transpose(w1, (0, 2, 1)).reshape(Kt * 2 * C1, C0)     # (Kt*2C1, C0)
    w2T = jnp.transpose(w2, (0, 2, 1)).reshape(Kt * 2 * C3, C2)     # (Kt*2C3, C2)
    b1 = jnp.concatenate([b1p, b1q], axis=-1).reshape(2 * C1, 1)    # (2C1, 1)
    b2 = jnp.concatenate([b2p, b2q], axis=-1).reshape(2 * C3, 1)    # (2C3, 1)
    thT = jnp.transpose(theta).astype(jnp.float32)                  # (C2, C1)
    aT = jnp.transpose(A_hat).astype(jnp.float32)                   # (N, N)

    # Channel-major, lane-dense input slab: (B, C0, T*N).
    xt = jnp.transpose(x, (0, 3, 1, 2)).reshape(B, C0, T * N).astype(jnp.float32)

    def const_spec(shape):
        return pl.BlockSpec(shape, lambda b, _n=len(shape): (0,) * _n)

    grid_spec = pltpu.PrefetchScalarGridSpec(
        num_scalar_prefetch=0,
        grid=(B,),                                        # >= 2 -> both v7x TCs busy
        in_specs=[
            pl.BlockSpec((None, C0, T * N), lambda b: (b, 0, 0)),   # x (per batch)
            const_spec((N, N)),                                     # A_hat^T
            const_spec((Kt * 2 * C1, C0)),                          # W1 fused^T
            const_spec((2 * C1, 1)),                                # b1 fused
            const_spec((C2, C1)),                                   # Theta^T
            const_spec((Kt * 2 * C3, C2)),                          # W2 fused^T
            const_spec((2 * C3, 1)),                                # b2 fused
        ],
        out_specs=pl.BlockSpec((None, C3, T2 * N), lambda b: (b, 0, 0)),
    )

    out = pl.pallas_call(
        kernel,
        out_shape=jax.ShapeDtypeStruct((B, C3, T2 * N), jnp.float32),
        grid_spec=grid_spec,
        compiler_params=pltpu.CompilerParams(
            dimension_semantics=("parallel",)),           # batch axis sharded on v7x
    )(xt, aT, w1T, b1, thT, w2T, b2)

    # Undo the channel-major kernel layout: (B, C3, T2*N) -> (B, T2, N, C3).
    return jnp.transpose(out.reshape(B, C3, T2, N), (0, 2, 3, 1))


# ---------------- pure-JAX reference (mirrors the PyTorch forward) ----------------
def _temporal_block_ref(x, wp, wq, bp, bq):
    Kt = wp.shape[0]
    T_out = x.shape[1] - Kt + 1
    p = bp.reshape(1, 1, 1, -1)
    q = bq.reshape(1, 1, 1, -1)
    for k in range(Kt):
        xk = x[:, k:k + T_out]
        p = p + jnp.einsum('btnc,cd->btnd', xk, wp[k])
        q = q + jnp.einsum('btnc,cd->btnd', xk, wq[k])
    return p * jax.nn.sigmoid(q)


def stconv_block_ref(x, A_hat, params, Kt):
    (w1p, w1q, b1p, b1q, theta, w2p, w2q, b2p, b2q) = params
    h1 = _temporal_block_ref(x, w1p, w1q, b1p, b1q)
    sp = jnp.einsum('ij,btjc->btic', A_hat, h1)
    h2 = jax.nn.relu(jnp.einsum('btic,cd->btid', sp, theta))
    h2 = jax.nn.relu(h2)   # outer ReLU in STConvBlock.forward
    return _temporal_block_ref(h2, w2p, w2q, b2p, b2q)


if __name__ == "__main__":
    B, T, N = 2, 12, 16
    C0, C1, C2, C3, Kt = 4, 8, 8, 4, 3   # temporal_in, spatial_in, spatial_out, temporal_out

    key = jax.random.PRNGKey(0)
    k = jax.random.split(key, 8)

    x = jax.random.normal(k[0], (B, T, N, C0), jnp.float32)

    # Normalized adjacency A_hat = D^{-1/2} (W + I) D^{-1/2}
    w_adj = jax.random.uniform(k[1], (N, N), jnp.float32)
    w_adj = (w_adj + w_adj.T) / 2.0 + jnp.eye(N, dtype=jnp.float32)
    d_inv_sqrt = 1.0 / jnp.sqrt(jnp.sum(w_adj, axis=1))
    A_hat = d_inv_sqrt[:, None] * w_adj * d_inv_sqrt[None, :]

    # TemporalBlock 1 params: Conv2d(C0, 2*C1, (Kt, 1)), PyTorch-style uniform init.
    bound1 = 1.0 / math.sqrt(C0 * Kt)
    w1 = jax.random.uniform(k[2], (Kt, C0, 2 * C1), jnp.float32, -bound1, bound1)
    b1 = jax.random.uniform(k[3], (1, 2 * C1), jnp.float32, -bound1, bound1)
    w1p, w1q = w1[..., :C1], w1[..., C1:]
    b1p, b1q = b1[:, :C1], b1[:, C1:]

    # SpatialBlock params: Theta (C1, C2), uniform(-1/sqrt(C2), 1/sqrt(C2)).
    stdv = 1.0 / math.sqrt(C2)
    theta = jax.random.uniform(k[4], (C1, C2), jnp.float32, -stdv, stdv)

    # TemporalBlock 2 params: Conv2d(C2, 2*C3, (Kt, 1)).
    bound2 = 1.0 / math.sqrt(C2 * Kt)
    w2 = jax.random.uniform(k[5], (Kt, C2, 2 * C3), jnp.float32, -bound2, bound2)
    b2 = jax.random.uniform(k[6], (1, 2 * C3), jnp.float32, -bound2, bound2)
    w2p, w2q = w2[..., :C3], w2[..., C3:]
    b2p, b2q = b2[:, :C3], b2[:, C3:]

    params = (w1p, w1q, b1p, b1q, theta, w2p, w2q, b2p, b2q)

    out = stconv_block_pallas(x, A_hat, params, Kt)
    out = jax.block_until_ready(out)

    ref = stconv_block_ref(x, A_hat, params, Kt)
    assert out.shape == (B, T - 2 * (Kt - 1), N, C3), out.shape
    if not jnp.allclose(out, ref, atol=1e-5, rtol=1e-5):
        raise AssertionError("Pallas output does not match JAX reference")
    print("KERNEL_OK")
</pallas_src>

<mosaic_0001>
module attributes {stable_mosaic.version = 11 : i64} {
  func.func @kernel(%arg0: i32, %arg1: memref<1x4x192xf32, #tpu.memory_space<vmem>>, %arg2: memref<16x16xf32, #tpu.memory_space<vmem>>, %arg3: memref<48x4xf32, #tpu.memory_space<vmem>>, %arg4: memref<16x1xf32, #tpu.memory_space<vmem>>, %arg5: memref<8x8xf32, #tpu.memory_space<vmem>>, %arg6: memref<24x8xf32, #tpu.memory_space<vmem>>, %arg7: memref<8x1xf32, #tpu.memory_space<vmem>>, %arg8: memref<1x4x128xf32, #tpu.memory_space<vmem>>) attributes {dimension_semantics = [#tpu.dimension_semantics<parallel>], iteration_bounds = array<i64: 2>, scalar_prefetch = 0 : i64, scratch_operands = 0 : i64, tpu.core_type = #tpu.core_type<tc>, window_params = [{transform_indices = @transform_0, window_bounds = array<i64: 1, 4, 192>}, {pipeline_mode = #tpu.pipeline_mode<synchronous>, transform_indices = @transform_1, window_bounds = array<i64: 16, 16>}, {pipeline_mode = #tpu.pipeline_mode<synchronous>, transform_indices = @transform_2, window_bounds = array<i64: 48, 4>}, {pipeline_mode = #tpu.pipeline_mode<synchronous>, transform_indices = @transform_3, window_bounds = array<i64: 16, 1>}, {pipeline_mode = #tpu.pipeline_mode<synchronous>, transform_indices = @transform_4, window_bounds = array<i64: 8, 8>}, {pipeline_mode = #tpu.pipeline_mode<synchronous>, transform_indices = @transform_5, window_bounds = array<i64: 24, 8>}, {pipeline_mode = #tpu.pipeline_mode<synchronous>, transform_indices = @transform_6, window_bounds = array<i64: 8, 1>}, {transform_indices = @transform_7, window_bounds = array<i64: 1, 4, 128>}]} {
    %c0 = arith.constant 0 : index
    %c0_0 = arith.constant 0 : index
    %c0_1 = arith.constant 0 : index
    %0 = vector.load %arg1[%c0, %c0_0, %c0_1] : memref<1x4x192xf32, #tpu.memory_space<vmem>>, vector<1x4x192xf32>
    %1 = vector.shape_cast %0 : vector<1x4x192xf32> to vector<4x192xf32>
    %c0_2 = arith.constant 0 : index
    %c0_3 = arith.constant 0 : index
    %2 = vector.load %arg2[%c0_2, %c0_3] : memref<16x16xf32, #tpu.memory_space<vmem>>, vector<16x16xf32>
    %c0_4 = arith.constant 0 : index
    %c0_5 = arith.constant 0 : index
    %3 = vector.load %arg5[%c0_4, %c0_5] : memref<8x8xf32, #tpu.memory_space<vmem>>, vector<8x8xf32>
    %c0_6 = arith.constant 0 : index
    %c0_7 = arith.constant 0 : index
    %4 = vector.load %arg3[%c0_6, %c0_7] : memref<48x4xf32, #tpu.memory_space<vmem>>, vector<48x4xf32>
    %cst = arith.constant dense<0.000000e+00> : vector<48x192xf32>
    %5 = tpu.matmul %4, %1, %cst {dimension_numbers = #tpu.dot_dimension_numbers<[1], [0], [0], [1], [0, 0, 1, 1], [], []>} : vector<48x4xf32>, vector<4x192xf32>, vector<48x192xf32> -> vector<48x192xf32>
    %6 = vector.extract_strided_slice %5 {offsets = [0, 0], sizes = [16, 160], strides = [1, 1]} : vector<48x192xf32> to vector<16x160xf32>
    %7 = vector.extract_strided_slice %5 {offsets = [16, 16], sizes = [16, 160], strides = [1, 1]} : vector<48x192xf32> to vector<16x160xf32>
    %8 = arith.addf %6, %7 : vector<16x160xf32>
    %9 = vector.extract_strided_slice %5 {offsets = [32, 32], sizes = [16, 160], strides = [1, 1]} : vector<48x192xf32> to vector<16x160xf32>
    %10 = arith.addf %8, %9 : vector<16x160xf32>
    %c0_8 = arith.constant 0 : index
    %c0_9 = arith.constant 0 : index
    %11 = vector.load %arg4[%c0_8, %c0_9] : memref<16x1xf32, #tpu.memory_space<vmem>>, vector<16x1xf32>
    %12 = vector.broadcast %11 : vector<16x1xf32> to vector<16x160xf32>
    %13 = arith.addf %10, %12 : vector<16x160xf32>
    %14 = vector.extract_strided_slice %13 {offsets = [0, 0], sizes = [8, 160], strides = [1, 1]} : vector<16x160xf32> to vector<8x160xf32>
    %15 = vector.extract_strided_slice %13 {offsets = [8, 0], sizes = [8, 160], strides = [1, 1]} : vector<16x160xf32> to vector<8x160xf32>
    %16 = arith.negf %15 : vector<8x160xf32>
    %17 = math.exp %16 : vector<8x160xf32>
    %cst_10 = arith.constant 1.000000e+00 : f32
    %18 = vector.broadcast %cst_10 : f32 to vector<8x160xf32>
    %19 = arith.addf %18, %17 : vector<8x160xf32>
    %20 = arith.divf %18, %19 : vector<8x160xf32>
    %21 = arith.mulf %14, %20 : vector<8x160xf32>
    %22 = vector.extract_strided_slice %21 {offsets = [0, 0], sizes = [8, 16], strides = [1, 1]} : vector<8x160xf32> to vector<8x16xf32>
    %23 = vector.extract_strided_slice %21 {offsets = [0, 16], sizes = [8, 16], strides = [1, 1]} : vector<8x160xf32> to vector<8x16xf32>
    %24 = vector.extract_strided_slice %21 {offsets = [0, 32], sizes = [8, 16], strides = [1, 1]} : vector<8x160xf32> to vector<8x16xf32>
    %25 = vector.extract_strided_slice %21 {offsets = [0, 48], sizes = [8, 16], strides = [1, 1]} : vector<8x160xf32> to vector<8x16xf32>
    %26 = vector.extract_strided_slice %21 {offsets = [0, 64], sizes = [8, 16], strides = [1, 1]} : vector<8x160xf32> to vector<8x16xf32>
    %27 = vector.extract_strided_slice %21 {offsets = [0, 80], sizes = [8, 16], strides = [1, 1]} : vector<8x160xf32> to vector<8x16xf32>
    %28 = vector.extract_strided_slice %21 {offsets = [0, 96], sizes = [8, 16], strides = [1, 1]} : vector<8x160xf32> to vector<8x16xf32>
    %29 = vector.extract_strided_slice %21 {offsets = [0, 112], sizes = [8, 16], strides = [1, 1]} : vector<8x160xf32> to vector<8x16xf32>
    %30 = vector.extract_strided_slice %21 {offsets = [0, 128], sizes = [8, 16], strides = [1, 1]} : vector<8x160xf32> to vector<8x16xf32>
    %31 = vector.extract_strided_slice %21 {offsets = [0, 144], sizes = [8, 16], strides = [1, 1]} : vector<8x160xf32> to vector<8x16xf32>
    %32 = tpu.concatenate %22, %23, %24, %25, %26, %27, %28, %29, %30, %31 in 0 : vector<8x16xf32>, vector<8x16xf32>, vector<8x16xf32>, vector<8x16xf32>, vector<8x16xf32>, vector<8x16xf32>, vector<8x16xf32>, vector<8x16xf32>, vector<8x16xf32>, vector<8x16xf32> -> vector<80x16xf32>
    %cst_11 = arith.constant dense<0.000000e+00> : vector<80x16xf32>
    %33 = tpu.matmul %32, %2, %cst_11 {dimension_numbers = #tpu.dot_dimension_numbers<[1], [0], [0], [1], [0, 0, 1, 1], [], []>} : vector<80x16xf32>, vector<16x16xf32>, vector<80x16xf32> -> vector<80x16xf32>
    %34 = vector.extract_strided_slice %33 {offsets = [0, 0], sizes = [8, 16], strides = [1, 1]} : vector<80x16xf32> to vector<8x16xf32>
    %35 = vector.extract_strided_slice %33 {offsets = [8, 0], sizes = [8, 16], strides = [1, 1]} : vector<80x16xf32> to vector<8x16xf32>
    %36 = vector.extract_strided_slice %33 {offsets = [16, 0], sizes = [8, 16], strides = [1, 1]} : vector<80x16xf32> to vector<8x16xf32>
    %37 = vector.extract_strided_slice %33 {offsets = [24, 0], sizes = [8, 16], strides = [1, 1]} : vector<80x16xf32> to vector<8x16xf32>
    %38 = vector.extract_strided_slice %33 {offsets = [32, 0], sizes = [8, 16], strides = [1, 1]} : vector<80x16xf32> to vector<8x16xf32>
    %39 = vector.extract_strided_slice %33 {offsets = [40, 0], sizes = [8, 16], strides = [1, 1]} : vector<80x16xf32> to vector<8x16xf32>
    %40 = vector.extract_strided_slice %33 {offsets = [48, 0], sizes = [8, 16], strides = [1, 1]} : vector<80x16xf32> to vector<8x16xf32>
    %41 = vector.extract_strided_slice %33 {offsets = [56, 0], sizes = [8, 16], strides = [1, 1]} : vector<80x16xf32> to vector<8x16xf32>
    %42 = vector.extract_strided_slice %33 {offsets = [64, 0], sizes = [8, 16], strides = [1, 1]} : vector<80x16xf32> to vector<8x16xf32>
    %43 = vector.extract_strided_slice %33 {offsets = [72, 0], sizes = [8, 16], strides = [1, 1]} : vector<80x16xf32> to vector<8x16xf32>
    %44 = tpu.concatenate %34, %35, %36, %37, %38, %39, %40, %41, %42, %43 in 1 : vector<8x16xf32>, vector<8x16xf32>, vector<8x16xf32>, vector<8x16xf32>, vector<8x16xf32>, vector<8x16xf32>, vector<8x16xf32>, vector<8x16xf32>, vector<8x16xf32>, vector<8x16xf32> -> vector<8x160xf32>
    %cst_12 = arith.constant dense<0.000000e+00> : vector<8x160xf32>
    %45 = tpu.matmul %3, %44, %cst_12 {dimension_numbers = #tpu.dot_dimension_numbers<[1], [0], [0], [1], [0, 0, 1, 1], [], []>} : vector<8x8xf32>, vector<8x160xf32>, vector<8x160xf32> -> vector<8x160xf32>
    %cst_13 = arith.constant 0.000000e+00 : f32
    %46 = vector.broadcast %cst_13 : f32 to vector<8x160xf32>
    %47 = arith.maximumf %45, %46 : vector<8x160xf32>
    %c0_14 = arith.constant 0 : index
    %c0_15 = arith.constant 0 : index
    %48 = vector.load %arg6[%c0_14, %c0_15] : memref<24x8xf32, #tpu.memory_space<vmem>>, vector<24x8xf32>
    %cst_16 = arith.constant dense<0.000000e+00> : vector<24x160xf32>
    %49 = tpu.matmul %48, %47, %cst_16 {dimension_numbers = #tpu.dot_dimension_numbers<[1], [0], [0], [1], [0, 0, 1, 1], [], []>} : vector<24x8xf32>, vector<8x160xf32>, vector<24x160xf32> -> vector<24x160xf32>
    %50 = vector.extract_strided_slice %49 {offsets = [0, 0], sizes = [8, 128], strides = [1, 1]} : vector<24x160xf32> to vector<8x128xf32>
    %51 = vector.extract_strided_slice %49 {offsets = [8, 16], sizes = [8, 128], strides = [1, 1]} : vector<24x160xf32> to vector<8x128xf32>
    %52 = arith.addf %50, %51 : vector<8x128xf32>
    %53 = vector.extract_strided_slice %49 {offsets = [16, 32], sizes = [8, 128], strides = [1, 1]} : vector<24x160xf32> to vector<8x128xf32>
    %54 = arith.addf %52, %53 : vector<8x128xf32>
    %c0_17 = arith.constant 0 : index
    %c0_18 = arith.constant 0 : index
    %55 = vector.load %arg7[%c0_17, %c0_18] : memref<8x1xf32, #tpu.memory_space<vmem>>, vector<8x1xf32>
    %56 = vector.broadcast %55 : vector<8x1xf32> to vector<8x128xf32>
    %57 = arith.addf %54, %56 : vector<8x128xf32>
    %58 = vector.extract_strided_slice %57 {offsets = [0, 0], sizes = [4, 128], strides = [1, 1]} : vector<8x128xf32> to vector<4x128xf32>
    %59 = vector.extract_strided_slice %57 {offsets = [4, 0], sizes = [4, 128], strides = [1, 1]} : vector<8x128xf32> to vector<4x128xf32>
    %60 = arith.negf %59 : vector<4x128xf32>
    %61 = math.exp %60 : vector<4x128xf32>
    %cst_19 = arith.constant 1.000000e+00 : f32
    %62 = vector.broadcast %cst_19 : f32 to vector<4x128xf32>
    %63 = arith.addf %62, %61 : vector<4x128xf32>
    %64 = arith.divf %62, %63 : vector<4x128xf32>
    %65 = arith.mulf %58, %64 : vector<4x128xf32>
    %c0_20 = arith.constant 0 : index
    %c0_21 = arith.constant 0 : index
    %c0_22 = arith.constant 0 : index
    %66 = vector.load %arg8[%c0_20, %c0_21, %c0_22] : memref<1x4x128xf32, #tpu.memory_space<vmem>>, vector<1x4x128xf32>
    %67 = vector.shape_cast %66 : vector<1x4x128xf32> to vector<4x128xf32>
    %68 = vector.shape_cast %65 : vector<4x128xf32> to vector<1x4x128xf32>
    tpu.vector_store %arg8[%c0_20, %c0_21, %c0_22], %68 {strides = array<i32>} : memref<1x4x128xf32, #tpu.memory_space<vmem>>, vector<1x4x128xf32>,
    return
  }
  func.func @transform_0(%arg0: i32) -> (i32, i32, i32) {
    %c0_i32 = arith.constant 0 : i32
    %c0_i32_0 = arith.constant 0 : i32
    %c0_i32_1 = arith.constant 0 : i32
    return %arg0, %c0_i32, %c0_i32_0 : i32, i32, i32
  }
  func.func @transform_1(%arg0: i32) -> (i32, i32) {
    %c0_i32 = arith.constant 0 : i32
    %c0_i32_0 = arith.constant 0 : i32
    %c0_i32_1 = arith.constant 0 : i32
    return %c0_i32, %c0_i32_0 : i32, i32
  }
  func.func @transform_2(%arg0: i32) -> (i32, i32) {
    %c0_i32 = arith.constant 0 : i32
    %c0_i32_0 = arith.constant 0 : i32
    %c0_i32_1 = arith.constant 0 : i32
    return %c0_i32, %c0_i32_0 : i32, i32
  }
  func.func @transform_3(%arg0: i32) -> (i32, i32) {
    %c0_i32 = arith.constant 0 : i32
    %c0_i32_0 = arith.constant 0 : i32
    %c0_i32_1 = arith.constant 0 : i32
    return %c0_i32, %c0_i32_0 : i32, i32
  }
  func.func @transform_4(%arg0: i32) -> (i32, i32) {
    %c0_i32 = arith.constant 0 : i32
    %c0_i32_0 = arith.constant 0 : i32
    %c0_i32_1 = arith.constant 0 : i32
    return %c0_i32, %c0_i32_0 : i32, i32
  }
  func.func @transform_5(%arg0: i32) -> (i32, i32) {
    %c0_i32 = arith.constant 0 : i32
    %c0_i32_0 = arith.constant 0 : i32
    %c0_i32_1 = arith.constant 0 : i32
    return %c0_i32, %c0_i32_0 : i32, i32
  }
  func.func @transform_6(%arg0: i32) -> (i32, i32) {
    %c0_i32 = arith.constant 0 : i32
    %c0_i32_0 = arith.constant 0 : i32
    %c0_i32_1 = arith.constant 0 : i32
    return %c0_i32, %c0_i32_0 : i32, i32
  }
  func.func @transform_7(%arg0: i32) -> (i32, i32, i32) {
    %c0_i32 = arith.constant 0 : i32
    %c0_i32_0 = arith.constant 0 : i32
    %c0_i32_1 = arith.constant 0 : i32
    return %arg0, %c0_i32, %c0_i32_0 : i32, i32, i32
  }
}

</mosaic_0001>

<llo_original>
// kernel: tpu_custom_call.1
$region0: #{tpu_custom_call.1}
  #allocation0 [shape = 'u32[]', space=smem, size = 0x4, offset = 0x4, fixed_abs, tag = 'smem constant byte address 0x4 - core index']
  #allocation1 [shape = 'u32[72,128]{1,0:T(1,128)}', space=vmem, size = 0x9000, scoped, tag = 'internal scratch']
  %s0 = inlined_call_operand.vmem [shape: f32[2,4,192], index: 0, kind: input, shape index: {}]
  %s1 = inlined_call_operand.vmem [shape: f32[16,16], index: 1, kind: input, shape index: {}]
  %s2 = inlined_call_operand.vmem [shape: f32[48,4], index: 2, kind: input, shape index: {}]
  %s3 = inlined_call_operand.vmem [shape: f32[16,1], index: 3, kind: input, shape index: {}]
  %s4 = inlined_call_operand.vmem [shape: f32[8,8], index: 4, kind: input, shape index: {}]
  %s5 = inlined_call_operand.vmem [shape: f32[24,8], index: 5, kind: input, shape index: {}]
  %s6 = inlined_call_operand.vmem [shape: f32[8,1], index: 6, kind: input, shape index: {}]
  %s7 = inlined_call_operand.hbm [shape: f32[2,4,128], index: 7, kind: output, shape index: {}]
  %s8 = sld [smem:[#allocation0]]
  $region61: #{tpu_custom_call.1} parent=0
    _
  %s10 = ssub.s32 1, %s8
  %s11 = scalar_select 0, %s10, %s8
  $region1: #{tpu_custom_call.1} parent=0
    #allocation2 [shape = 'u8[4096]{0}', space=vmem, size = 0x1000, scoped, tag = 'output window, operand 0']
    #allocation3 [shape = 's32[2]{0}', space=sflag, size = 0x8, scoped, tag = 'scoped memory for tpu_custom_call.1']
    %12 = vsyncpa [#allocation3], 0
    %s13 = scalar_lea.sflag [#allocation3], 1
    %14 = vsyncpa %s13, 0
    loop: start=0, step=1, limit=4
    $region2: #{tpu_custom_call.1} parent=1 // loop_pre_header
      _
    $region3: #{tpu_custom_call.1} parent=1 // loop_header
      %s16 = sphi 0, %s20
      %p17 = scmp.ge.s32.totalorder %s16, 4
      %s26 = sphi 0, %s28
      %s29 = sphi 0, %s26
      %s30 = sphi 0, %s29
      %s46 = sphi 0, %s30
      %s50 = sphi 0, %s50
      %s52 = sphi 0, %s50
      %s53 = sphi 0, %s52
      %s67 = sphi 0, %s53
      %s71 = sphi 0, %s71
      %s73 = sphi 0, %s71
      %s74 = sphi 0, %s73
      %s88 = sphi 0, %s74
      %s92 = sphi 0, %s92
      %s94 = sphi 0, %s92
      %s95 = sphi 0, %s94
      %s109 = sphi 0, %s95
      %s113 = sphi 0, %s113
      %s115 = sphi 0, %s113
      %s116 = sphi 0, %s115
      %s130 = sphi 0, %s116
      %s134 = sphi 0, %s134
      %s136 = sphi 0, %s134
      %s137 = sphi 0, %s136
      %s151 = sphi 0, %s137
      %s155 = sphi 0, %s155
      %s157 = sphi 0, %s155
      %s158 = sphi 0, %s157
      %s172 = sphi 0, %s158
      %s178 = sphi 0, %s180
      %s181 = sphi 0, %s178
      %s182 = sphi 0, %s181
      %s198 = sphi 0, %s182
    $region4: #{tpu_custom_call.1} parent=1 // loop_header_branch
      %19 = sbr.rel (%p17) target = $region8
    $region5: #{tpu_custom_call.1} parent=1 // loop_body
      %s21 = ssub.s32 %s16, 1
      %s22 = ssub.s32 %s16, 2
      %s23 = sadd.s32 %s16, 1
      %s24 = ssub.s32 %s16, %s23
      %p25 = scmp.eq.s32.totalorder %s24, 0
      %s27 = sadd.s32 %s26, 1
      %s28 = scalar_select %p25, %s26, %s27
      %p31 = pneg %p25
      %p32 = scmp.eq.s32.totalorder %s16, 1
      %p33 = por %p31, %p32
      %p34 = scmp.ne.s32.totalorder %s26, %s29
      %p35 = scmp.eq.s32.totalorder %s16, 0
      %p36 = por %p34, %p35
      %p37 = scmp.ne.s32.totalorder %s26, %s29
      %p38 = scmp.eq.s32.totalorder %s21, 1
      %p39 = por %p37, %p38
      %p40 = scmp.ne.s32.totalorder %s29, %s30
      %p41 = scmp.eq.s32.totalorder %s21, 0
      %p42 = por %p40, %p41
      %p43 = scmp.ne.s32.totalorder %s29, %s30
      %p44 = scmp.eq.s32.totalorder %s22, 1
      %p45 = por %p43, %p44
      %p47 = scmp.ne.s32.totalorder %s30, %s46
      %p48 = scmp.eq.s32.totalorder %s22, 0
      %p49 = por %p47, %p48
      %s51 = sadd.s32 %s50, 1
      %p54 = scmp.eq.s32.totalorder %s16, 1
      %p55 = scmp.ne.s32.totalorder %s50, %s52
      %p56 = scmp.eq.s32.totalorder %s16, 0
      %p57 = por %p55, %p56
      %p58 = scmp.ne.s32.totalorder %s50, %s52
      %p59 = scmp.eq.s32.totalorder %s21, 1
      %p60 = por %p58, %p59
      %p61 = scmp.ne.s32.totalorder %s52, %s53
      %p62 = scmp.eq.s32.totalorder %s21, 0
      %p63 = por %p61, %p62
      %p64 = scmp.ne.s32.totalorder %s52, %s53
      %p65 = scmp.eq.s32.totalorder %s22, 1
      %p66 = por %p64, %p65
      %p68 = scmp.ne.s32.totalorder %s53, %s67
      %p69 = scmp.eq.s32.totalorder %s22, 0
      %p70 = por %p68, %p69
      %s72 = sadd.s32 %s71, 1
      %p75 = scmp.eq.s32.totalorder %s16, 1
      %p76 = scmp.ne.s32.totalorder %s71, %s73
      %p77 = scmp.eq.s32.totalorder %s16, 0
      %p78 = por %p76, %p77
      %p79 = scmp.ne.s32.totalorder %s71, %s73
      %p80 = scmp.eq.s32.totalorder %s21, 1
      %p81 = por %p79, %p80
      %p82 = scmp.ne.s32.totalorder %s73, %s74
      %p83 = scmp.eq.s32.totalorder %s21, 0
      %p84 = por %p82, %p83
      %p85 = scmp.ne.s32.totalorder %s73, %s74
      %p86 = scmp.eq.s32.totalorder %s22, 1
      %p87 = por %p85, %p86
      %p89 = scmp.ne.s32.totalorder %s74, %s88
      %p90 = scmp.eq.s32.totalorder %s22, 0
      %p91 = por %p89, %p90
      %s93 = sadd.s32 %s92, 1
      %p96 = scmp.eq.s32.totalorder %s16, 1
      %p97 = scmp.ne.s32.totalorder %s92, %s94
      %p98 = scmp.eq.s32.totalorder %s16, 0
      %p99 = por %p97, %p98
      %p100 = scmp.ne.s32.totalorder %s92, %s94
      %p101 = scmp.eq.s32.totalorder %s21, 1
      %p102 = por %p100, %p101
      %p103 = scmp.ne.s32.totalorder %s94, %s95
      %p104 = scmp.eq.s32.totalorder %s21, 0
      %p105 = por %p103, %p104
      %p106 = scmp.ne.s32.totalorder %s94, %s95
      %p107 = scmp.eq.s32.totalorder %s22, 1
      %p108 = por %p106, %p107
      %p110 = scmp.ne.s32.totalorder %s95, %s109
      %p111 = scmp.eq.s32.totalorder %s22, 0
      %p112 = por %p110, %p111
      %s114 = sadd.s32 %s113, 1
      %p117 = scmp.eq.s32.totalorder %s16, 1
      %p118 = scmp.ne.s32.totalorder %s113, %s115
      %p119 = scmp.eq.s32.totalorder %s16, 0
      %p120 = por %p118, %p119
      %p121 = scmp.ne.s32.totalorder %s113, %s115
      %p122 = scmp.eq.s32.totalorder %s21, 1
      %p123 = por %p121, %p122
      %p124 = scmp.ne.s32.totalorder %s115, %s116
      %p125 = scmp.eq.s32.totalorder %s21, 0
      %p126 = por %p124, %p125
      %p127 = scmp.ne.s32.totalorder %s115, %s116
      %p128 = scmp.eq.s32.totalorder %s22, 1
      %p129 = por %p127, %p128
      %p131 = scmp.ne.s32.totalorder %s116, %s130
      %p132 = scmp.eq.s32.totalorder %s22, 0
      %p133 = por %p131, %p132
      %s135 = sadd.s32 %s134, 1
      %p138 = scmp.eq.s32.totalorder %s16, 1
      %p139 = scmp.ne.s32.totalorder %s134, %s136
      %p140 = scmp.eq.s32.totalorder %s16, 0
      %p141 = por %p139, %p140
      %p142 = scmp.ne.s32.totalorder %s134, %s136
      %p143 = scmp.eq.s32.totalorder %s21, 1
      %p144 = por %p142, %p143
      %p145 = scmp.ne.s32.totalorder %s136, %s137
      %p146 = scmp.eq.s32.totalorder %s21, 0
      %p147 = por %p145, %p146
      %p148 = scmp.ne.s32.totalorder %s136, %s137
      %p149 = scmp.eq.s32.totalorder %s22, 1
      %p150 = por %p148, %p149
      %p152 = scmp.ne.s32.totalorder %s137, %s151
      %p153 = scmp.eq.s32.totalorder %s22, 0
      %p154 = por %p152, %p153
      %s156 = sadd.s32 %s155, 1
      %p159 = scmp.eq.s32.totalorder %s16, 1
      %p160 = scmp.ne.s32.totalorder %s155, %s157
      %p161 = scmp.eq.s32.totalorder %s16, 0
      %p162 = por %p160, %p161
      %p163 = scmp.ne.s32.totalorder %s155, %s157
      %p164 = scmp.eq.s32.totalorder %s21, 1
      %p165 = por %p163, %p164
      %p166 = scmp.ne.s32.totalorder %s157, %s158
      %p167 = scmp.eq.s32.totalorder %s21, 0
      %p168 = por %p166, %p167
      %p169 = scmp.ne.s32.totalorder %s157, %s158
      %p170 = scmp.eq.s32.totalorder %s22, 1
      %p171 = por %p169, %p170
      %p173 = scmp.ne.s32.totalorder %s158, %s172
      %p174 = scmp.eq.s32.totalorder %s22, 0
      %p175 = por %p173, %p174
      %s176 = ssub.s32 %s16, %s23
      %p177 = scmp.eq.s32.totalorder %s176, 0
      %s179 = sadd.s32 %s178, 1
      %s180 = scalar_select %p177, %s178, %s179
      %p183 = pneg %p177
      %p184 = scmp.eq.s32.totalorder %s16, 1
      %p185 = por %p183, %p184
      %p186 = scmp.ne.s32.totalorder %s178, %s181
      %p187 = scmp.eq.s32.totalorder %s16, 0
      %p188 = por %p186, %p187
      %p189 = scmp.ne.s32.totalorder %s178, %s181
      %p190 = scmp.eq.s32.totalorder %s21, 1
      %p191 = por %p189, %p190
      %p192 = scmp.ne.s32.totalorder %s181, %s182
      %p193 = scmp.eq.s32.totalorder %s21, 0
      %p194 = por %p192, %p193
      %p195 = scmp.ne.s32.totalorder %s181, %s182
      %p196 = scmp.eq.s32.totalorder %s22, 1
      %p197 = por %p195, %p196
      %p199 = scmp.ne.s32.totalorder %s182, %s198
      %p200 = scmp.eq.s32.totalorder %s22, 0
      %p201 = por %p199, %p200
      %p202 = scmp.le.s32.totalorder 1, %s16
      %p203 = scmp.lt.s32.totalorder %s16, 3
      %p204 = pnand %p202, %p203
      %p205 = pneg %p204
      // Predicated region
      $region9: #{tpu_custom_call.1} parent=5 // pred_check
        _
      $region10: #{tpu_custom_call.1} parent=5 // pred_check_branch
        %207 = sbr.rel (%p204) target = $region12
      $region11: #{tpu_custom_call.1} parent=5 // pred_region
        %s208 = ssub.s32 %s16, 1
        // Predicated region
        $region13: #{tpu_custom_call.1} parent=11 // pred_check
          %p209 = pneg %p63
        $region14: #{tpu_custom_call.1} parent=11 // pred_check_branch
          %211 = sbr.rel (%p209) target = $region16
        $region15: #{tpu_custom_call.1} parent=11 // pred_region
          _
        $region16: #{tpu_custom_call.1} parent=11 // pred_fallthru
          _
        // Predicated region
        $region17: #{tpu_custom_call.1} parent=11 // pred_check
          %p212 = pneg %p84
        $region18: #{tpu_custom_call.1} parent=11 // pred_check_branch
          %214 = sbr.rel (%p212) target = $region20
        $region19: #{tpu_custom_call.1} parent=11 // pred_region
          _
        $region20: #{tpu_custom_call.1} parent=11 // pred_fallthru
          _
        // Predicated region
        $region21: #{tpu_custom_call.1} parent=11 // pred_check
          %p215 = pneg %p105
        $region22: #{tpu_custom_call.1} parent=11 // pred_check_branch
          %217 = sbr.rel (%p215) target = $region24
        $region23: #{tpu_custom_call.1} parent=11 // pred_region
          _
        $region24: #{tpu_custom_call.1} parent=11 // pred_fallthru
          _
        // Predicated region
        $region25: #{tpu_custom_call.1} parent=11 // pred_check
          %p218 = pneg %p126
        $region26: #{tpu_custom_call.1} parent=11 // pred_check_branch
          %220 = sbr.rel (%p218) target = $region28
        $region27: #{tpu_custom_call.1} parent=11 // pred_region
          _
        $region28: #{tpu_custom_call.1} parent=11 // pred_fallthru
          _
        // Predicated region
        $region29: #{tpu_custom_call.1} parent=11 // pred_check
          %p221 = pneg %p147
        $region30: #{tpu_custom_call.1} parent=11 // pred_check_branch
          %223 = sbr.rel (%p221) target = $region32
        $region31: #{tpu_custom_call.1} parent=11 // pred_region
          _
        $region32: #{tpu_custom_call.1} parent=11 // pred_fallthru
          _
        // Predicated region
        $region33: #{tpu_custom_call.1} parent=11 // pred_check
          %p224 = pneg %p168
        $region34: #{tpu_custom_call.1} parent=11 // pred_check_branch
          %226 = sbr.rel (%p224) target = $region36
        $region35: #{tpu_custom_call.1} parent=11 // pred_region
          _
        $region36: #{tpu_custom_call.1} parent=11 // pred_fallthru
          _
      $region12: #{tpu_custom_call.1} parent=5 // pred_fallthru
        _
      %p227 = scmp.lt.s32.totalorder %s16, 2
      // Predicated region
      $region37: #{tpu_custom_call.1} parent=5 // pred_check
        %p228 = pneg %p227
      $region38: #{tpu_custom_call.1} parent=5 // pred_check_branch
        %230 = sbr.rel (%p228) target = $region40
      $region39: #{tpu_custom_call.1} parent=5 // pred_region
        // Predicated region
        $region41: #{tpu_custom_call.1} parent=39 // pred_check
          %p231 = pneg %p36
        $region42: #{tpu_custom_call.1} parent=39 // pred_check_branch
          %233 = sbr.rel (%p231) target = $region44
        $region43: #{tpu_custom_call.1} parent=39 // pred_region
          %p234 = scmp.lt.s32.totalorder %s16, 1
          %s235 = scalar_select %p234, %s16, 1
          %s236 = smul.addr %s235, 2
          %s237 = smul.addr %s236, 4
          %s238 = scalar_lea.vmem %s0, %s237
        $region44: #{tpu_custom_call.1} parent=39 // pred_fallthru
          _
      $region40: #{tpu_custom_call.1} parent=5 // pred_fallthru
        _
      %p239 = scmp.le.s32.totalorder 1, %s16
      %p240 = scmp.lt.s32.totalorder %s16, 3
      %p241 = pnand %p239, %p240
      %p242 = pneg %p241
      // Predicated region
      $region45: #{tpu_custom_call.1} parent=5 // pred_check
        _
      $region46: #{tpu_custom_call.1} parent=5 // pred_check_branch
        %244 = sbr.rel (%p241) target = $region48
      $region47: #{tpu_custom_call.1} parent=5 // pred_region
        %s245 = ssub.s32 %s16, 1
        %p246 = scmp.lt.s32.totalorder %s21, 1
        %s247 = scalar_select %p246, %s21, 1
        %s248 = smul.addr %s247, 2
        %s249 = smul.addr %s248, 4
        %s250 = scalar_lea.vmem %s0, %s249
        %p251 = pneg %p42
        %p252 = pneg %p39
        %p253 = pneg %p63
        %p254 = pneg %p60
        %p255 = pneg %p84
        %p256 = pneg %p81
        %p257 = pneg %p105
        %p258 = pneg %p102
        %p259 = pneg %p126
        %p260 = pneg %p123
        %p261 = pneg %p147
        %p262 = pneg %p144
        %p263 = pneg %p168
        %p264 = pneg %p165
        %p265 = pneg %p194
        %p266 = pneg %p191
        %s267 = sand.u32 %s181, 1
        %s268 = scalar_lea.sflag [#allocation3], %s267
        %s269 = sand.u32 %s181, 1
        %s270 = smul.addr %s269, 4
        %s271 = scalar_lea.vmem [#allocation2], %s270
        %p272 = scmp.lt.s32.totalorder %s21, 1
        %s273 = scalar_select %p272, %s21, 1
        %s274 = smul.addr %s273, 2
        %s275 = smul.addr %s274, 4
        %s276 = scalar_lea.vmem %s0, %s275
        %v277 = vld [vmem:[%s276] sm:$0xff]
        %v278 = vld [vmem:[%s1] sm:$0xff]
        %v279 = vld [vmem:[%s1 + $0x8] sm:$0xff]
        %v280 = vld [vmem:[%s4] sm:$0xff]
        %v281 = vld [vmem:[%s2] sm:$0xff]
        %v282 = vld [vmem:[%s2 + $0x8] sm:$0xff]
        %v283 = vld [vmem:[%s2 + $0x10] sm:$0xff]
        %v284 = vld [vmem:[%s2 + $0x18] sm:$0xff]
        %v285 = vld [vmem:[%s2 + $0x20] sm:$0xff]
        %v286 = vld [vmem:[%s2 + $0x28] sm:$0xff]
        %288 = vst [vmem:[#allocation1] ss:$2 sm:$0xff] %v277
        %v289 = vld.sshfl [vmem:[#allocation1] sm:$0xff pattern:$0x75316420]
        %v290 = vld.sshfl [vmem:[#allocation1 + $0x8] sm:$0xff pattern:$0x75316420]
        %vm291 = vcmask 31744
        %v293 = vsel %vm291, %v281, 0
        %v296 = vsel %vm291, %v282, 0
        %v299 = vsel %vm291, %v283, 0
        %v302 = vsel %vm291, %v284, 0
        %v305 = vsel %vm291, %v285, 0
        %v308 = vsel %vm291, %v286, 0
        %vm310 = vcmask 1043456
        %v311 = vsel %vm310, %v289, 0
        %v313 = vsel %vm310, %v290, 0
        %315 = vmatpush.msra.mxu0 0.0
        %316 = vmatpush.msra.mxu0 0.0
        %317 = vmatpush.msra.mxu0 0.0
        %318 = vmatpush.msra.mxu0 0.0
        %319 = vmatpush.msra.mxu0 0.0
        %320 = vmatpush.msra.mxu0 0.0
        %321 = vmatpush.msra.mxu0 0.0
        %322 = vmatpush.msra.mxu0 0.0
        %323 = vmatpush.msra.mxu0 0.0
        %324 = vmatpush.msra.mxu0 0.0
        %325 = vmatpush.msra.mxu0 0.0
        %326 = vmatpush.msra.mxu0 0.0
        %327 = vmatpush.msra.mxu0 0.0
        %328 = vmatpush.msra.mxu0 0.0
        %329 = vmatpush.msra.mxu0 0.0
        %330 = vmatpush.msra.mxu0 %v311
        %331 = vmatmul.f32.gmra.mxu0 %v293
        %v332 = vpop.f32.mrf.mxu0
        %v333 = vadd.f32 0.0, %v332
        %334 = vmatmul.f32.gmra.mxu0 %v296
        %v335 = vpop.f32.mrf.mxu0
        %v336 = vadd.f32 0.0, %v335
        %337 = vmatmul.f32.gmra.mxu0 %v299
        %v338 = vpop.f32.mrf.mxu0
        %v339 = vadd.f32 0.0, %v338
        %340 = vmatmul.f32.gmra.mxu0 %v302
        %v341 = vpop.f32.mrf.mxu0
        %v342 = vadd.f32 0.0, %v341
        %343 = vmatmul.f32.gmra.mxu0 %v305
        %v344 = vpop.f32.mrf.mxu0
        %v345 = vadd.f32 0.0, %v344
        %346 = vmatmul.f32.gmra.mxu0 %v308
        %v347 = vpop.f32.mrf.mxu0
        %v348 = vadd.f32 0.0, %v347
        %349 = vdwg.mxu0
        %350 = vmatpush.msra.mxu0 0.0
        %351 = vmatpush.msra.mxu0 0.0
        %352 = vmatpush.msra.mxu0 0.0
        %353 = vmatpush.msra.mxu0 0.0
        %354 = vmatpush.msra.mxu0 0.0
        %355 = vmatpush.msra.mxu0 0.0
        %356 = vmatpush.msra.mxu0 0.0
        %357 = vmatpush.msra.mxu0 0.0
        %358 = vmatpush.msra.mxu0 0.0
        %359 = vmatpush.msra.mxu0 0.0
        %360 = vmatpush.msra.mxu0 0.0
        %361 = vmatpush.msra.mxu0 0.0
        %362 = vmatpush.msra.mxu0 0.0
        %363 = vmatpush.msra.mxu0 0.0
        %364 = vmatpush.msra.mxu0 0.0
        %365 = vmatpush.msra.mxu0 %v313
        %366 = vmatmul.f32.gmra.mxu0 %v293
        %v367 = vpop.f32.mrf.mxu0
        %v368 = vadd.f32 0.0, %v367
        %369 = vmatmul.f32.gmra.mxu0 %v296
        %v370 = vpop.f32.mrf.mxu0
        %v371 = vadd.f32 0.0, %v370
        %372 = vmatmul.f32.gmra.mxu0 %v299
        %v373 = vpop.f32.mrf.mxu0
        %v374 = vadd.f32 0.0, %v373
        %375 = vmatmul.f32.gmra.mxu0 %v302
        %v376 = vpop.f32.mrf.mxu0
        %v377 = vadd.f32 0.0, %v376
        %378 = vmatmul.f32.gmra.mxu0 %v305
        %v379 = vpop.f32.mrf.mxu0
        %v380 = vadd.f32 0.0, %v379
        %381 = vmatmul.f32.gmra.mxu0 %v308
        %v382 = vpop.f32.mrf.mxu0
        %v383 = vadd.f32 0.0, %v382
        %384 = vdwg.mxu0
        %389 = vrot.lane.b32.xlu0 %v339, 112
        %v390 = vpop.permute.xlu0 %389
        %391 = vrot.lane.b32.xlu0 %v374, 112
        %v392 = vpop.permute.xlu0 %391
        %393 = vrot.lane.b32.xlu0 %v342, 112
        %v394 = vpop.permute.xlu0 %393
        %395 = vrot.lane.b32.xlu0 %v377, 112
        %v396 = vpop.permute.xlu0 %395
        %vm397 = vcmask 916480
        %v398 = vsel %vm397, %v390, %v392
        %v399 = vsel %vm397, %v394, %v396
        %v404 = vadd.f32 %v333, %v398
        %v405 = vadd.f32 %v368, %v392
        %v406 = vadd.f32 %v336, %v399
        %v407 = vadd.f32 %v371, %v396
        %412 = vrot.lane.b32.xlu0 %v345, 96
        %v413 = vpop.permute.xlu0 %412
        %414 = vrot.lane.b32.xlu0 %v380, 96
        %v415 = vpop.permute.xlu0 %414
        %416 = vrot.lane.b32.xlu0 %v348, 96
        %v417 = vpop.permute.xlu0 %416
        %418 = vrot.lane.b32.xlu0 %v383, 96
        %v419 = vpop.permute.xlu0 %418
        %vm420 = vcmask 785408
        %v421 = vsel %vm420, %v413, %v415
        %v422 = vsel %vm420, %v417, %v419
        %v427 = vadd.f32 %v404, %v421
        %v428 = vadd.f32 %v405, %v415
        %v429 = vadd.f32 %v406, %v422
        %v430 = vadd.f32 %v407, %v419
        %v431 = vld [vmem:[%s3] sm:$0xff]
        %v432 = vld [vmem:[%s3 + $0x8] sm:$0xff]
        %434 = vset.pattern.permute.xlu0 0
        %435 = vperm.xlu0 %434, %v431
        %v436 = vpop.permute.xlu0 %435
        %439 = vset.pattern.permute.xlu0 0
        %440 = vperm.xlu0 %439, %v432
        %v441 = vpop.permute.xlu0 %440
        %v443 = vadd.f32 %v427, %v436
        %v444 = vadd.f32 %v428, %v436
        %v445 = vadd.f32 %v429, %v441
        %v446 = vadd.f32 %v430, %v441
        %v447 = vxor.u32 %v445, 2147483648
        %v448 = vxor.u32 %v446, 2147483648
        %v449 = vmul.f32 %v447, 1.442695
        %v450 = vpow.pop %v449
        %v451 = vmul.f32 %v448, 1.442695
        %v452 = vpow.pop %v451
        %v453 = vadd.f32 %v450, 1.0
        %v454 = vadd.f32 %v452, 1.0
        %v455 = vrcp.pop %v453
        %v456 = vmul.f32 %v453, %v455
        %v457 = vsub.f32 1.0, %v456
        %v458 = vmul.f32 %v455, %v457
        %v459 = vadd.f32 %v455, %v458
        %vm460 = vweird.f32 %v453
        %vm461 = vweird.f32 %v455
        %vm462 = vmor %vm460, %vm461
        %v463 = vsel %vm462, %v455, %v459
        %v464 = vand.u32 2147483647, %v453
        %vm465 = vcmp.eq.f32.partialorder %v464, 8.507059e+37
        %v466 = vand.u32 %v453, 2147483648
        %v467 = vor.u32 1.1754944e-38, %v466
        %v468 = vsel %vm465, %v467, %v463
        %v469 = vmul.f32 1.0, %v468
        %v470 = vrcp.pop %v454
        %v471 = vmul.f32 %v454, %v470
        %v472 = vsub.f32 1.0, %v471
        %v473 = vmul.f32 %v470, %v472
        %v474 = vadd.f32 %v470, %v473
        %vm475 = vweird.f32 %v454
        %vm476 = vweird.f32 %v470
        %vm477 = vmor %vm475, %vm476
        %v478 = vsel %vm477, %v470, %v474
        %v479 = vand.u32 2147483647, %v454
        %vm480 = vcmp.eq.f32.partialorder %v479, 8.507059e+37
        %v481 = vand.u32 %v454, 2147483648
        %v482 = vor.u32 1.1754944e-38, %v481
        %v483 = vsel %vm480, %v482, %v478
        %v484 = vmul.f32 1.0, %v483
        %v485 = vmul.f32 %v443, %v469
        %v486 = vmul.f32 %v444, %v484
        %488 = vrot.lane.b32.xlu0 %v485, 112
        %v489 = vpop.permute.xlu0 %488
        %490 = vrot.lane.b32.xlu0 %v485, 96
        %v491 = vpop.permute.xlu0 %490
        %492 = vrot.lane.b32.xlu0 %v485, 80
        %v493 = vpop.permute.xlu0 %492
        %494 = vrot.lane.b32.xlu0 %v485, 64
        %v495 = vpop.permute.xlu0 %494
        %496 = vrot.lane.b32.xlu0 %v485, 48
        %v497 = vpop.permute.xlu0 %496
        %498 = vrot.lane.b32.xlu0 %v485, 32
        %v499 = vpop.permute.xlu0 %498
        %500 = vrot.lane.b32.xlu0 %v485, 16
        %v501 = vpop.permute.xlu0 %500
        %503 = vrot.lane.b32.xlu0 %v486, 112
        %v504 = vpop.permute.xlu0 %503
        %vm505 = vcmask 130048
        %v506 = vsel %vm505, %v485, 0
        %v508 = vsel %vm505, %v489, 0
        %v510 = vsel %vm505, %v491, 0
        %v512 = vsel %vm505, %v493, 0
        %v514 = vsel %vm505, %v495, 0
        %v516 = vsel %vm505, %v497, 0
        %v518 = vsel %vm505, %v499, 0
        %v520 = vsel %vm505, %v501, 0
        %v522 = vsel %vm505, %v486, 0
        %v524 = vsel %vm505, %v504, 0
        %526 = vmatpush.msra.mxu0 0.0
        %527 = vmatpush.msra.mxu0 0.0
        %528 = vmatpush.msra.mxu0 0.0
        %529 = vmatpush.msra.mxu0 0.0
        %530 = vmatpush.msra.mxu0 0.0
        %531 = vmatpush.msra.mxu0 0.0
        %532 = vmatpush.msra.mxu0 0.0
        %533 = vmatpush.msra.mxu0 0.0
        %534 = vmatpush.msra.mxu0 0.0
        %535 = vmatpush.msra.mxu0 0.0
        %536 = vmatpush.msra.mxu0 0.0
        %537 = vmatpush.msra.mxu0 0.0
        %538 = vmatpush.msra.mxu0 0.0
        %539 = vmatpush.msra.mxu0 0.0
        %540 = vmatpush.msra.mxu0 %v279
        %541 = vmatpush.msra.mxu0 %v278
        %542 = vmatmul.f32.gmra.mxu0 %v506
        %v543 = vpop.f32.mrf.mxu0
        %v544 = vadd.f32 0.0, %v543
        %545 = vmatmul.f32.gmra.mxu0 %v508
        %v546 = vpop.f32.mrf.mxu0
        %v547 = vadd.f32 0.0, %v546
        %548 = vmatmul.f32.gmra.mxu0 %v510
        %v549 = vpop.f32.mrf.mxu0
        %v550 = vadd.f32 0.0, %v549
        %551 = vmatmul.f32.gmra.mxu0 %v512
        %v552 = vpop.f32.mrf.mxu0
        %v553 = vadd.f32 0.0, %v552
        %554 = vmatmul.f32.gmra.mxu0 %v514
        %v555 = vpop.f32.mrf.mxu0
        %v556 = vadd.f32 0.0, %v555
        %557 = vmatmul.f32.gmra.mxu0 %v516
        %v558 = vpop.f32.mrf.mxu0
        %v559 = vadd.f32 0.0, %v558
        %560 = vmatmul.f32.gmra.mxu0 %v518
        %v561 = vpop.f32.mrf.mxu0
        %v562 = vadd.f32 0.0, %v561
        %563 = vmatmul.f32.gmra.mxu0 %v520
        %v564 = vpop.f32.mrf.mxu0
        %v565 = vadd.f32 0.0, %v564
        %566 = vmatmul.f32.gmra.mxu0 %v522
        %v567 = vpop.f32.mrf.mxu0
        %v568 = vadd.f32 0.0, %v567
        %569 = vmatmul.f32.gmra.mxu0 %v524
        %v570 = vpop.f32.mrf.mxu0
        %v571 = vadd.f32 0.0, %v570
        %572 = vdwg.mxu0
        %574 = vrot.lane.b32.xlu0 %v547, 16
        %v575 = vpop.permute.xlu0 %574
        %578 = vrot.lane.b32.xlu0 %v550, 32
        %v579 = vpop.permute.xlu0 %578
        %582 = vrot.lane.b32.xlu0 %v553, 48
        %v583 = vpop.permute.xlu0 %582
        %586 = vrot.lane.b32.xlu0 %v556, 64
        %v587 = vpop.permute.xlu0 %586
        %590 = vrot.lane.b32.xlu0 %v559, 80
        %v591 = vpop.permute.xlu0 %590
        %594 = vrot.lane.b32.xlu0 %v562, 96
        %v595 = vpop.permute.xlu0 %594
        %598 = vrot.lane.b32.xlu0 %v565, 112
        %v599 = vpop.permute.xlu0 %598
        %602 = vrot.lane.b32.xlu0 %v571, 16
        %v603 = vpop.permute.xlu0 %602
        %v605 = vsel %vm505, %v544, %v575
        %vm606 = vcmask 261120
        %v607 = vsel %vm606, %v605, %v579
        %vm608 = vcmask 392192
        %v609 = vsel %vm608, %v607, %v583
        %vm610 = vcmask 523264
        %v611 = vsel %vm610, %v609, %v587
        %vm612 = vcmask 654336
        %v613 = vsel %vm612, %v611, %v591
        %v614 = vsel %vm420, %v613, %v595
        %v615 = vsel %vm397, %v614, %v599
        %v616 = vsel %vm505, %v568, %v603
        %vm617 = vcmask 64512
        %v619 = vsel %vm617, %v280, 0
        %621 = vmatpush.msra.mxu0 0.0
        %622 = vmatpush.msra.mxu0 0.0
        %623 = vmatpush.msra.mxu0 0.0
        %624 = vmatpush.msra.mxu0 0.0
        %625 = vmatpush.msra.mxu0 0.0
        %626 = vmatpush.msra.mxu0 0.0
        %627 = vmatpush.msra.mxu0 0.0
        %628 = vmatpush.msra.mxu0 0.0
        %629 = vmatpush.msra.mxu0 0.0
        %630 = vmatpush.msra.mxu0 0.0
        %631 = vmatpush.msra.mxu0 0.0
        %632 = vmatpush.msra.mxu0 0.0
        %633 = vmatpush.msra.mxu0 0.0
        %634 = vmatpush.msra.mxu0 0.0
        %635 = vmatpush.msra.mxu0 0.0
        %636 = vmatpush.msra.mxu0 %v615
        %637 = vmatmul.f32.gmra.mxu0 %v619
        %v638 = vpop.f32.mrf.mxu0
        %v639 = vadd.f32 0.0, %v638
        %640 = vdwg.mxu0
        %641 = vmatpush.msra.mxu0 0.0
        %642 = vmatpush.msra.mxu0 0.0
        %643 = vmatpush.msra.mxu0 0.0
        %644 = vmatpush.msra.mxu0 0.0
        %645 = vmatpush.msra.mxu0 0.0
        %646 = vmatpush.msra.mxu0 0.0
        %647 = vmatpush.msra.mxu0 0.0
        %648 = vmatpush.msra.mxu0 0.0
        %649 = vmatpush.msra.mxu0 0.0
        %650 = vmatpush.msra.mxu0 0.0
        %651 = vmatpush.msra.mxu0 0.0
        %652 = vmatpush.msra.mxu0 0.0
        %653 = vmatpush.msra.mxu0 0.0
        %654 = vmatpush.msra.mxu0 0.0
        %655 = vmatpush.msra.mxu0 0.0
        %656 = vmatpush.msra.mxu0 %v616
        %657 = vmatmul.f32.gmra.mxu0 %v619
        %v658 = vpop.f32.mrf.mxu0
        %v659 = vadd.f32 0.0, %v658
        %660 = vdwg.mxu0
        %v661 = vmax.f32 %v639, 0.0
        %v662 = vmax.f32 %v659, 0.0
        %v663 = vld [vmem:[%s5] sm:$0xff]
        %v664 = vld [vmem:[%s5 + $0x8] sm:$0xff]
        %v665 = vld [vmem:[%s5 + $0x10] sm:$0xff]
        %v667 = vsel %vm617, %v663, 0
        %v670 = vsel %vm617, %v664, 0
        %v673 = vsel %vm617, %v665, 0
        %675 = vmatpush.msra.mxu0 0.0
        %676 = vmatpush.msra.mxu0 0.0
        %677 = vmatpush.msra.mxu0 0.0
        %678 = vmatpush.msra.mxu0 0.0
        %679 = vmatpush.msra.mxu0 0.0
        %680 = vmatpush.msra.mxu0 0.0
        %681 = vmatpush.msra.mxu0 0.0
        %682 = vmatpush.msra.mxu0 0.0
        %683 = vmatpush.msra.mxu0 0.0
        %684 = vmatpush.msra.mxu0 0.0
        %685 = vmatpush.msra.mxu0 0.0
        %686 = vmatpush.msra.mxu0 0.0
        %687 = vmatpush.msra.mxu0 0.0
        %688 = vmatpush.msra.mxu0 0.0
        %689 = vmatpush.msra.mxu0 0.0
        %690 = vmatpush.msra.mxu0 %v661
        %691 = vmatmul.f32.gmra.mxu0 %v667
        %v692 = vpop.f32.mrf.mxu0
        %v693 = vadd.f32 0.0, %v692
        %694 = vmatmul.f32.gmra.mxu0 %v670
        %v695 = vpop.f32.mrf.mxu0
        %v696 = vadd.f32 0.0, %v695
        %697 = vmatmul.f32.gmra.mxu0 %v673
        %v698 = vpop.f32.mrf.mxu0
        %v699 = vadd.f32 0.0, %v698
        %700 = vdwg.mxu0
        %701 = vmatpush.msra.mxu0 0.0
        %702 = vmatpush.msra.mxu0 0.0
        %703 = vmatpush.msra.mxu0 0.0
        %704 = vmatpush.msra.mxu0 0.0
        %705 = vmatpush.msra.mxu0 0.0
        %706 = vmatpush.msra.mxu0 0.0
        %707 = vmatpush.msra.mxu0 0.0
        %708 = vmatpush.msra.mxu0 0.0
        %709 = vmatpush.msra.mxu0 0.0
        %710 = vmatpush.msra.mxu0 0.0
        %711 = vmatpush.msra.mxu0 0.0
        %712 = vmatpush.msra.mxu0 0.0
        %713 = vmatpush.msra.mxu0 0.0
        %714 = vmatpush.msra.mxu0 0.0
        %715 = vmatpush.msra.mxu0 0.0
        %716 = vmatpush.msra.mxu0 %v662
        %717 = vmatmul.f32.gmra.mxu0 %v667
        %v718 = vpop.f32.mrf.mxu0
        %719 = vmatmul.f32.gmra.mxu0 %v670
        %v720 = vpop.f32.mrf.mxu0
        %v721 = vadd.f32 0.0, %v720
        %722 = vmatmul.f32.gmra.mxu0 %v673
        %v723 = vpop.f32.mrf.mxu0
        %v724 = vadd.f32 0.0, %v723
        %725 = vdwg.mxu0
        %728 = vrot.lane.b32.xlu0 %v696, 112
        %v729 = vpop.permute.xlu0 %728
        %730 = vrot.lane.b32.xlu0 %v721, 112
        %v731 = vpop.permute.xlu0 %730
        %v732 = vsel %vm397, %v729, %v731
        %v734 = vadd.f32 %v693, %v732
        %737 = vrot.lane.b32.xlu0 %v699, 96
        %v738 = vpop.permute.xlu0 %737
        %739 = vrot.lane.b32.xlu0 %v724, 96
        %v740 = vpop.permute.xlu0 %739
        %v741 = vsel %vm420, %v738, %v740
        %v743 = vadd.f32 %v734, %v741
        %v744 = vld [vmem:[%s6] sm:$0xff]
        %746 = vset.pattern.permute.xlu0 0
        %747 = vperm.xlu0 %746, %v744
        %v748 = vpop.permute.xlu0 %747
        %v750 = vadd.f32 %v743, %v748
        %v751 = vxor.u32 %v750, 2147483648
        %v752 = vmul.f32 %v751, 1.442695
        %v753 = vpow.pop %v752
        %v754 = vadd.f32 %v753, 1.0
        %v755 = vrcp.pop %v754
        %v756 = vmul.f32 %v754, %v755
        %v757 = vsub.f32 1.0, %v756
        %v758 = vmul.f32 %v755, %v757
        %v759 = vadd.f32 %v755, %v758
        %vm760 = vweird.f32 %v754
        %vm761 = vweird.f32 %v755
        %vm762 = vmor %vm760, %vm761
        %v763 = vsel %vm762, %v755, %v759
        %v764 = vand.u32 2147483647, %v754
        %vm765 = vcmp.eq.f32.partialorder %v764, 8.507059e+37
        %v766 = vand.u32 %v754, 2147483648
        %v767 = vor.u32 1.1754944e-38, %v766
        %v768 = vsel %vm765, %v767, %v763
        %v769 = vmul.f32 1.0, %v768
        %v771 = vrot.slane %v769, 4
        %v773 = vmul.f32 %v750, %v771
        %774 = vst [vmem:[%s271] sm:$0xf] %v773
        %s775 = sand.u32 %s181, 1
        %s776 = scalar_lea.sflag [#allocation3], %s775
        %s777 = sand.u32 %s181, 1
        %s778 = smul.addr %s777, 4
        %s779 = scalar_lea.vmem [#allocation2], %s778
        // Predicated region
        $region49: #{tpu_custom_call.1} parent=47 // pred_check
          %p780 = pneg %p191
        $region50: #{tpu_custom_call.1} parent=47 // pred_check_branch
          %782 = sbr.rel (%p780) target = $region52
        $region51: #{tpu_custom_call.1} parent=47 // pred_region
          %784 = vsyncadd %s776, 0
          %s785 = smul.addr %s21, 4
          %s786 = scalar_lea.hbm %s7, %s785
          %s788 = sshll.u32 %s779, 4
          %s789 = int_to_ptr.vmem [resolvable:$true] %s788
          %s790 = sshll.u32 %s786, 4
          %s791 = int_to_ptr.hbm [resolvable:$true] %s790
          %793 = dma.vmem_to_hbm [thread:$0]  %s789, 64, %s791, %s776
        $region52: #{tpu_custom_call.1} parent=47 // pred_fallthru
          _
      $region48: #{tpu_custom_call.1} parent=5 // pred_fallthru
        _
      %p794 = scmp.le.s32.totalorder 2, %s16
      // Predicated region
      $region53: #{tpu_custom_call.1} parent=5 // pred_check
        %p795 = pneg %p794
      $region54: #{tpu_custom_call.1} parent=5 // pred_check_branch
        %797 = sbr.rel (%p795) target = $region56
      $region55: #{tpu_custom_call.1} parent=5 // pred_region
        %s798 = ssub.s32 %s16, 2
        // Predicated region
        $region57: #{tpu_custom_call.1} parent=55 // pred_check
          %p799 = pneg %p197
        $region58: #{tpu_custom_call.1} parent=55 // pred_check_branch
          %801 = sbr.rel (%p799) target = $region60
        $region59: #{tpu_custom_call.1} parent=55 // pred_region
          %s802 = sand.u32 %s182, 1
          %s803 = scalar_lea.sflag [#allocation3], %s802
          %s804 = sand.u32 %s182, 1
          %s805 = smul.addr %s804, 4
          %s806 = scalar_lea.vmem [#allocation2], %s805
          %808 = dma.done %s803, 64
        $region60: #{tpu_custom_call.1} parent=55 // pred_fallthru
          _
      $region56: #{tpu_custom_call.1} parent=5 // pred_fallthru
        _
    $region6: #{tpu_custom_call.1} parent=1 // loop_footer
      %s20 = sadd.s32 1, %s16
    $region7: #{tpu_custom_call.1} parent=1 // loop_footer_branch
      %15 = sbr.rel target = $region3
    $region8: #{tpu_custom_call.1} parent=1 // loop_exit
      _
    %809 = vsyncpa [#allocation3], 1
    %s810 = scalar_lea.sflag [#allocation3], 1
    %811 = vsyncpa %s810, 1

</llo_original>
